<compile_context>
chip_gen: v7x
topology: tpu7x:2x2x1
jax: 0.10.0
libtpu: 0.0.40
codegen_flags: <defaults>
</compile_context>

<pallas_src>
import jax
import jax.numpy as jnp
from jax.experimental import pallas as pl
from jax.experimental.pallas import tpu as pltpu


def actor_critic_kernel(x_ref, w_ref, b_ref, out_ref):
    x = x_ref[...]                                   # (B, 4)

    # F.normalize(x, dim=0): per-column x * rsqrt(max(sum(x^2), eps^2)),
    # identical forward value to x / max(||col||_2, 1e-12).
    sumsq = jnp.sum(x * x, axis=0, keepdims=True)
    x = x * jax.lax.rsqrt(jnp.maximum(sumsq, 1e-24))

    # Trunk: y = relu(l2(relu(l1(x))))
    y = jnp.dot(x, w_ref[0:4, 0:25],
                preferred_element_type=jnp.float32) + b_ref[0:1, 0:25]
    y = jnp.maximum(y, 0.0)                          # (B, 25)
    y = jnp.dot(y, w_ref[8:33, 0:50],
                preferred_element_type=jnp.float32) + b_ref[1:2, 0:50]
    y = jnp.maximum(y, 0.0)                          # (B, 50)

    # Fused actor + l3 head (one lane-dense (50,128) dot):
    #   cols 0:2  -> actor logits, cols 2:27 -> l3 pre-activation, cols 27: -> 0
    h = jnp.dot(y, w_ref[40:90, :],
                preferred_element_type=jnp.float32) + b_ref[2:3, :]   # (B,128)

    # log_softmax over the BATCH axis (dim=0), per column.  Only cols 0:2 are
    # consumed; doing the reduction full-width keeps everything lane-dense.
    m = jnp.max(h, axis=0, keepdims=True)
    lse = jnp.log(jnp.sum(jnp.exp(h - m), axis=0, keepdims=True)) + m
    actor_full = h - lse                             # cols 0:2 are valid

    # Critic branch: c = relu(l3(y.detach())) lives in cols 2:27 of relu(h).
    # The critic weight block has nonzero rows only at 130:155 and a single
    # nonzero output column (col 2), so cols 0:2 / 27: of relu(h) contribute
    # nothing -- no masking or narrow slicing needed.
    c = jnp.maximum(h, 0.0)                          # (B, 128)
    crit_full = jnp.tanh(
        jnp.dot(c, w_ref[128:256, :],
                preferred_element_type=jnp.float32) + b_ref[3:4, :]
    )                                                # col 2 = critic, rest = 0

    col = jax.lax.broadcasted_iota(jnp.int32, h.shape, 1)
    out_ref[...] = jnp.where(col < 2, actor_full, crit_full)


def pack_params(params):
    """Pack the 10 PyTorch-layout (out,in) Linear params into two zero-padded
    slabs.  Called ONCE when parameters are created, not per forward call."""
    (w1, b1, w2, b2, wa, ba, w3, b3, wc, bc) = params
    f32 = jnp.float32

    w = jnp.zeros((256, 128), f32)
    w = w.at[0:4, 0:25].set(w1.T.astype(f32))        # l1
    w = w.at[8:33, 0:50].set(w2.T.astype(f32))       # l2
    w = w.at[40:90, 0:2].set(wa.T.astype(f32))       # actor_lin1 (fused head)
    w = w.at[40:90, 2:27].set(w3.T.astype(f32))      # l3         (fused head)
    w = w.at[130:155, 2:3].set(wc.T.astype(f32))     # critic_lin1

    b = jnp.zeros((8, 128), f32)
    b = b.at[0, 0:25].set(b1.astype(f32))
    b = b.at[1, 0:50].set(b2.astype(f32))
    b = b.at[2, 0:2].set(ba.astype(f32))
    b = b.at[2, 2:27].set(b3.astype(f32))
    b = b.at[3, 2:3].set(bc.astype(f32))
    return w, b


@jax.jit
def actor_critic_forward(x, packed_params):
    """x: (B, 4) f32, packed_params = pack_params(...) -> (actor (B,2), critic (B,1))."""
    w_slab, b_slab = packed_params
    B = x.shape[0]
    vmem = pl.BlockSpec(memory_space=pltpu.MemorySpace.VMEM)
    out = pl.pallas_call(
        actor_critic_kernel,
        out_shape=jax.ShapeDtypeStruct((B, 128), jnp.float32),
        in_specs=[vmem, vmem, vmem],
        out_specs=vmem,
    )(x, w_slab, b_slab)
    return out[:, 0:2], out[:, 2:3]


def init_params(key):
    """Deterministic synthetic weights with the same shapes as the PyTorch module."""
    keys = jax.random.split(key, 10)

    def lin(kw, kb, out_f, in_f):
        bound = 1.0 / jnp.sqrt(in_f)
        w = jax.random.uniform(kw, (out_f, in_f), jnp.float32, -bound, bound)
        b = jax.random.uniform(kb, (out_f,), jnp.float32, -bound, bound)
        return w, b

    w1, b1 = lin(keys[0], keys[1], 25, 4)     # l1
    w2, b2 = lin(keys[2], keys[3], 50, 25)    # l2
    wa, ba = lin(keys[4], keys[5], 2, 50)     # actor_lin1
    w3, b3 = lin(keys[6], keys[7], 25, 50)    # l3
    wc, bc = lin(keys[8], keys[9], 1, 25)     # critic_lin1
    return (w1, b1, w2, b2, wa, ba, w3, b3, wc, bc)


def _reference_forward(x, params):
    """Pure-JAX reference mirroring the PyTorch forward (for a sanity check)."""
    (w1, b1, w2, b2, wa, ba, w3, b3, wc, bc) = params
    norm = jnp.sqrt(jnp.sum(x * x, axis=0, keepdims=True))
    xn = x / jnp.maximum(norm, 1e-12)
    y = jax.nn.relu(xn @ w1.T + b1)
    y = jax.nn.relu(y @ w2.T + b2)
    actor = jax.nn.log_softmax(y @ wa.T + ba, axis=0)
    c = jax.nn.relu(y @ w3.T + b3)
    critic = jnp.tanh(c @ wc.T + bc)
    return actor, critic


if __name__ == "__main__":
    key = jax.random.PRNGKey(0)
    k_x, k_p = jax.random.split(key)

    B = 8
    x = jax.random.normal(k_x, (B, 4), dtype=jnp.float32)
    params = init_params(k_p)
    packed = pack_params(params)   # one-time packing, outside the per-call path

    actor, critic = actor_critic_forward(x, packed)
    jax.block_until_ready((actor, critic))

    # lightweight correctness check against the pure-JAX reference
    ref_actor, ref_critic = _reference_forward(x, params)
    assert actor.shape == (B, 2) and critic.shape == (B, 1)
    assert jnp.allclose(actor, ref_actor, atol=1e-4, rtol=1e-4)
    assert jnp.allclose(critic, ref_critic, atol=1e-4, rtol=1e-4)

    print("KERNEL_OK")
</pallas_src>

<mosaic_0001>
module attributes {stable_mosaic.version = 11 : i64} {
  func.func @actor_critic_kernel(%arg0: memref<8x4xf32, #tpu.memory_space<vmem>>, %arg1: memref<256x128xf32, #tpu.memory_space<vmem>>, %arg2: memref<8x128xf32, #tpu.memory_space<vmem>>, %arg3: memref<8x128xf32, #tpu.memory_space<vmem>>) attributes {dimension_semantics = [], scalar_prefetch = 0 : i64, scratch_operands = 0 : i64, tpu.core_type = #tpu.core_type<tc>} {
    %c0 = arith.constant 0 : index
    %c0_0 = arith.constant 0 : index
    %0 = vector.load %arg0[%c0, %c0_0] : memref<8x4xf32, #tpu.memory_space<vmem>>, vector<8x4xf32>
    %1 = arith.mulf %0, %0 : vector<8x4xf32>
    %cst = arith.constant dense<0.000000e+00> : vector<4xf32>
    %2 = vector.multi_reduction <add>, %1, %cst [0] : vector<8x4xf32> to vector<4xf32>
    %3 = vector.shape_cast %2 : vector<4xf32> to vector<1x4xf32>
    %cst_1 = arith.constant 1.000000e-24 : f32
    %4 = vector.broadcast %cst_1 : f32 to vector<1x4xf32>
    %5 = arith.maximumf %3, %4 : vector<1x4xf32>
    %6 = math.rsqrt %5 : vector<1x4xf32>
    %7 = vector.broadcast %6 : vector<1x4xf32> to vector<8x4xf32>
    %8 = arith.mulf %0, %7 : vector<8x4xf32>
    %c0_2 = arith.constant 0 : index
    %c0_3 = arith.constant 0 : index
    %9 = vector.load %arg1[%c0_2, %c0_3] : memref<256x128xf32, #tpu.memory_space<vmem>>, vector<4x25xf32>
    %cst_4 = arith.constant dense<0.000000e+00> : vector<8x25xf32>
    %10 = tpu.matmul %8, %9, %cst_4 {dimension_numbers = #tpu.dot_dimension_numbers<[1], [0], [0], [1], [0, 0, 1, 1], [], []>} : vector<8x4xf32>, vector<4x25xf32>, vector<8x25xf32> -> vector<8x25xf32>
    %c0_5 = arith.constant 0 : index
    %c0_6 = arith.constant 0 : index
    %11 = vector.load %arg2[%c0_5, %c0_6] : memref<8x128xf32, #tpu.memory_space<vmem>>, vector<1x25xf32>
    %12 = vector.broadcast %11 : vector<1x25xf32> to vector<8x25xf32>
    %13 = arith.addf %10, %12 : vector<8x25xf32>
    %cst_7 = arith.constant 0.000000e+00 : f32
    %14 = vector.broadcast %cst_7 : f32 to vector<8x25xf32>
    %15 = arith.maximumf %13, %14 : vector<8x25xf32>
    %c8 = arith.constant 8 : index
    %c0_8 = arith.constant 0 : index
    %16 = vector.load %arg1[%c8, %c0_8] : memref<256x128xf32, #tpu.memory_space<vmem>>, vector<25x50xf32>
    %cst_9 = arith.constant dense<0.000000e+00> : vector<8x50xf32>
    %17 = tpu.matmul %15, %16, %cst_9 {dimension_numbers = #tpu.dot_dimension_numbers<[1], [0], [0], [1], [0, 0, 1, 1], [], []>} : vector<8x25xf32>, vector<25x50xf32>, vector<8x50xf32> -> vector<8x50xf32>
    %c1 = arith.constant 1 : index
    %c0_10 = arith.constant 0 : index
    %18 = vector.load %arg2[%c1, %c0_10] : memref<8x128xf32, #tpu.memory_space<vmem>>, vector<1x50xf32>
    %19 = vector.broadcast %18 : vector<1x50xf32> to vector<8x50xf32>
    %20 = arith.addf %17, %19 : vector<8x50xf32>
    %cst_11 = arith.constant 0.000000e+00 : f32
    %21 = vector.broadcast %cst_11 : f32 to vector<8x50xf32>
    %22 = arith.maximumf %20, %21 : vector<8x50xf32>
    %c40 = arith.constant 40 : index
    %c0_12 = arith.constant 0 : index
    %23 = vector.load %arg1[%c40, %c0_12] : memref<256x128xf32, #tpu.memory_space<vmem>>, vector<50x128xf32>
    %cst_13 = arith.constant dense<0.000000e+00> : vector<8x128xf32>
    %24 = tpu.matmul %22, %23, %cst_13 {dimension_numbers = #tpu.dot_dimension_numbers<[1], [0], [0], [1], [0, 0, 1, 1], [], []>} : vector<8x50xf32>, vector<50x128xf32>, vector<8x128xf32> -> vector<8x128xf32>
    %c2 = arith.constant 2 : index
    %c0_14 = arith.constant 0 : index
    %25 = vector.load %arg2[%c2, %c0_14] : memref<8x128xf32, #tpu.memory_space<vmem>>, vector<1x128xf32>
    %26 = vector.broadcast %25 : vector<1x128xf32> to vector<8x128xf32>
    %27 = arith.addf %24, %26 : vector<8x128xf32>
    %cst_15 = arith.constant dense<0xFF800000> : vector<128xf32>
    %28 = vector.multi_reduction <maximumf>, %27, %cst_15 [0] : vector<8x128xf32> to vector<128xf32>
    %29 = vector.shape_cast %28 : vector<128xf32> to vector<1x128xf32>
    %30 = vector.broadcast %29 : vector<1x128xf32> to vector<8x128xf32>
    %31 = arith.subf %27, %30 : vector<8x128xf32>
    %32 = math.exp %31 : vector<8x128xf32>
    %cst_16 = arith.constant dense<0.000000e+00> : vector<128xf32>
    %33 = vector.multi_reduction <add>, %32, %cst_16 [0] : vector<8x128xf32> to vector<128xf32>
    %34 = vector.shape_cast %33 : vector<128xf32> to vector<1x128xf32>
    %35 = math.log %34 : vector<1x128xf32>
    %36 = arith.addf %35, %29 : vector<1x128xf32>
    %37 = vector.broadcast %36 : vector<1x128xf32> to vector<8x128xf32>
    %38 = arith.subf %27, %37 : vector<8x128xf32>
    %cst_17 = arith.constant 0.000000e+00 : f32
    %39 = vector.broadcast %cst_17 : f32 to vector<8x128xf32>
    %40 = arith.maximumf %27, %39 : vector<8x128xf32>
    %c128 = arith.constant 128 : index
    %c0_18 = arith.constant 0 : index
    %41 = vector.load %arg1[%c128, %c0_18] : memref<256x128xf32, #tpu.memory_space<vmem>>, vector<128x128xf32>
    %cst_19 = arith.constant dense<0.000000e+00> : vector<8x128xf32>
    %42 = tpu.matmul %40, %41, %cst_19 {dimension_numbers = #tpu.dot_dimension_numbers<[1], [0], [0], [1], [0, 0, 1, 1], [], []>} : vector<8x128xf32>, vector<128x128xf32>, vector<8x128xf32> -> vector<8x128xf32>
    %c3 = arith.constant 3 : index
    %c0_20 = arith.constant 0 : index
    %43 = vector.load %arg2[%c3, %c0_20] : memref<8x128xf32, #tpu.memory_space<vmem>>, vector<1x128xf32>
    %44 = vector.broadcast %43 : vector<1x128xf32> to vector<8x128xf32>
    %45 = arith.addf %42, %44 : vector<8x128xf32>
    %46 = math.tanh %45 : vector<8x128xf32>
    %47 = tpu.iota {dimensions = array<i32: 1>} : vector<8x128xi32>
    %c2_i32 = arith.constant 2 : i32
    %48 = vector.broadcast %c2_i32 : i32 to vector<8x128xi32>
    %49 = arith.cmpi slt, %47, %48 : vector<8x128xi32>
    %50 = arith.select %49, %38, %46 : vector<8x128xi1>, vector<8x128xf32>
    %c0_21 = arith.constant 0 : index
    %c0_22 = arith.constant 0 : index
    %51 = vector.load %arg3[%c0_21, %c0_22] : memref<8x128xf32, #tpu.memory_space<vmem>>, vector<8x128xf32>
    tpu.vector_store %arg3[%c0_21, %c0_22], %50 {strides = array<i32>} : memref<8x128xf32, #tpu.memory_space<vmem>>, vector<8x128xf32>,
    return
  }
}

</mosaic_0001>

<llo_original>
// kernel: actor_critic_forward.1
$region0: #{actor_critic_forward.1}
  #allocation0 [shape = 'u32[]', space=smem, size = 0x4, offset = 0x4, fixed_abs, tag = 'smem constant byte address 0x4 - core index']
  #allocation1 [shape = 'u32[144,128]{1,0:T(1,128)}', space=vmem, size = 0x12000, scoped, tag = 'internal scratch']
  %s0 = inlined_call_operand.vmem [shape: f32[8,4], index: 0, kind: input, shape index: {}]
  %s1 = inlined_call_operand.hbm [shape: f32[256,128], index: 1, kind: input, shape index: {}]
  %s2 = inlined_call_operand.vmem [shape: f32[8,128], index: 2, kind: input, shape index: {}]
  %s3 = inlined_call_operand.vmem [shape: f32[8,128], index: 3, kind: output, shape index: {}]
  %s4 = sld [smem:[#allocation0]]
  $region26: #{actor_critic_forward.1} parent=0
    _
  %s6 = ssub.s32 1, %s4
  %s7 = scalar_select 0, %s6, %s4
  $region1: #{actor_critic_forward.1} parent=0
    #allocation2 [shape = 'u8[131072]{0}', space=vmem, size = 0x20000, scoped, tag = 'input window, operand 1, single buffered']
    #allocation3 [shape = 's32[1]{0}', space=sflag, size = 0x4, scoped, tag = 'scoped memory for actor_critic_forward.1']
    %8 = vsyncpa [#allocation3], 0
    // Predicated region
    $region2: #{actor_critic_forward.1} parent=1 // pred_check
      _
    $region3: #{actor_critic_forward.1} parent=1 // pred_check_branch
      %10 = sbr.rel (0) target = $region5
    $region4: #{actor_critic_forward.1} parent=1 // pred_region
      _
    $region5: #{actor_critic_forward.1} parent=1 // pred_fallthru
      _
    // Predicated region
    $region6: #{actor_critic_forward.1} parent=1 // pred_check
      _
    $region7: #{actor_critic_forward.1} parent=1 // pred_check_branch
      %12 = sbr.rel (0) target = $region9
    $region8: #{actor_critic_forward.1} parent=1 // pred_region
      %s14 = ssub.s32 4096, 4096
      %15 = vsyncadd [#allocation3], %s14
      %s16 = sshll.u32 [#allocation2], 4
      %s17 = int_to_ptr.vmem [resolvable:$true] %s16
      %22 = dma.hbm_to_vmem [thread:$0]  %s1, 4096, %s17, [#allocation3], 128, 128, 8
    $region9: #{actor_critic_forward.1} parent=1 // pred_fallthru
      _
    // Predicated region
    $region10: #{actor_critic_forward.1} parent=1 // pred_check
      _
    $region11: #{actor_critic_forward.1} parent=1 // pred_check_branch
      %24 = sbr.rel (0) target = $region13
    $region12: #{actor_critic_forward.1} parent=1 // pred_region
      _
    $region13: #{actor_critic_forward.1} parent=1 // pred_fallthru
      _
    // Predicated region
    $region14: #{actor_critic_forward.1} parent=1 // pred_check
      _
    $region15: #{actor_critic_forward.1} parent=1 // pred_check_branch
      %26 = sbr.rel (0) target = $region17
    $region16: #{actor_critic_forward.1} parent=1 // pred_region
      %27 = dma.done [#allocation3], 4096
    $region17: #{actor_critic_forward.1} parent=1 // pred_fallthru
      _
    %v28 = vld [vmem:[%s0] sm:$0xff]
    %v29 = vmul.f32 %v28, %v28
    %vm30 = vcmask 31744
    %v31 = vsel %vm30, %v29, 0.0
    %v32 = vrot.slane %v31, 4
    %v33 = vadd.f32 %v31, %v32
    %v34 = vrot.slane %v33, 2
    %v35 = vadd.f32 %v33, %v34
    %v36 = vrot.slane %v35, 1
    %v37 = vadd.f32 %v35, %v36
    %v38 = vmax.f32 %v37, 1e-24
    %v39 = vrsqrt.pop %v38
    %v40 = vmul.f32 %v28, %v39
    %v41 = vld [vmem:[#allocation2] sm:$0xf]
    %v42 = vld [vmem:[%s2] sm:$0x1]
    %v43 = vlaneseq
    %v44 = vshrl.u32 %v43, 7
    %v45 = vsub.s32 0, %v44
    %v46 = vrot.slane %v42, %v45
    %v48 = vsel %vm30, %v40, 0
    %vm50 = vcmask 1043456
    %v52 = vsel %vm50, %v41, 0
    %54 = vmatprep.subr.mxu0 0.0
    %55 = vmatpush1.msra.mxu0 %v52
    %56 = vmatprep.subr.mxu0 0.0
    %57 = vmatpush1.msra.mxu0 0.0
    %58 = vmatprep.subr.mxu0 0.0
    %59 = vmatpush1.msra.mxu0 0.0
    %60 = vmatprep.subr.mxu0 0.0
    %61 = vmatpush1.msra.mxu0 0.0
    %62 = vmatprep.subr.mxu0 0.0
    %63 = vmatpush1.msra.mxu0 0.0
    %64 = vmatprep.subr.mxu0 0.0
    %65 = vmatpush1.msra.mxu0 0.0
    %66 = vmatprep.subr.mxu0 0.0
    %67 = vmatpush1.msra.mxu0 0.0
    %68 = vmatprep.subr.mxu0 0.0
    %69 = vmatpush1.msra.mxu0 0.0
    %70 = vmatprep.subr.mxu0 0.0
    %71 = vmatpush1.msra.mxu0 0.0
    %72 = vmatprep.subr.mxu0 0.0
    %73 = vmatpush1.msra.mxu0 0.0
    %74 = vmatprep.subr.mxu0 0.0
    %75 = vmatpush1.msra.mxu0 0.0
    %76 = vmatprep.subr.mxu0 0.0
    %77 = vmatpush1.msra.mxu0 0.0
    %78 = vmatprep.subr.mxu0 0.0
    %79 = vmatpush1.msra.mxu0 0.0
    %80 = vmatprep.subr.mxu0 0.0
    %81 = vmatpush1.msra.mxu0 0.0
    %82 = vmatprep.subr.mxu0 0.0
    %83 = vmatpush1.msra.mxu0 0.0
    %84 = vmatprep.subr.mxu0 0.0
    %85 = vmatpush1.msra.mxu0 0.0
    %86 = vmatprep.subr.mxu0 0.0
    %87 = vmatpush1.msra.mxu0 0.0
    %88 = vmatprep.subr.mxu0 0.0
    %89 = vmatpush1.msra.mxu0 0.0
    %90 = vmatprep.subr.mxu0 0.0
    %91 = vmatpush1.msra.mxu0 0.0
    %92 = vmatprep.subr.mxu0 0.0
    %93 = vmatpush1.msra.mxu0 0.0
    %94 = vmatprep.subr.mxu0 0.0
    %95 = vmatpush1.msra.mxu0 0.0
    %96 = vmatprep.subr.mxu0 0.0
    %97 = vmatpush1.msra.mxu0 0.0
    %98 = vmatprep.subr.mxu0 0.0
    %99 = vmatpush1.msra.mxu0 0.0
    %100 = vmatprep.subr.mxu0 0.0
    %101 = vmatpush1.msra.mxu0 0.0
    %102 = vmatprep.subr.mxu0 0.0
    %103 = vmatpush1.msra.mxu0 0.0
    %104 = vmatprep.subr.mxu0 0.0
    %105 = vmatpush1.msra.mxu0 0.0
    %106 = vmatprep.subr.mxu0 0.0
    %107 = vmatpush1.msra.mxu0 0.0
    %108 = vmatprep.subr.mxu0 0.0
    %109 = vmatpush1.msra.mxu0 0.0
    %110 = vmatprep.subr.mxu0 0.0
    %111 = vmatpush1.msra.mxu0 0.0
    %112 = vmatprep.subr.mxu0 0.0
    %113 = vmatpush1.msra.mxu0 0.0
    %114 = vmatprep.subr.mxu0 0.0
    %115 = vmatpush1.msra.mxu0 0.0
    %116 = vmatprep.subr.mxu0 0.0
    %117 = vmatpush1.msra.mxu0 0.0
    %118 = vmatprep.mubr.f32.mxu0 0.0
    %119 = vmatmul.mubr.f32.gmra.mrb[0].mxu0 %v48
    %v120 = vpop.f32.mrb[0].mxu0
    %v121 = vadd.f32 %v46, %v120
    %v122 = vpop.f32.mrb[0].mxu0
    %123 = vdwg.mxu0
    %v124 = vmax.f32 %v121, 0.0
    %v125 = vld [vmem:[#allocation2 + $0x8] sm:$0xff]
    %v126 = vld [vmem:[#allocation2 + $0x10] sm:$0xff]
    %v127 = vld [vmem:[#allocation2 + $0x18] sm:$0xff]
    %v128 = vld [vmem:[#allocation2 + $0x20] sm:$0x1]
    %v129 = vld [vmem:[%s2 + $0x1] sm:$0x1]
    %v130 = vlaneseq
    %v131 = vshrl.u32 %v130, 7
    %v132 = vsub.s32 0, %v131
    %v133 = vrot.slane %v129, %v132
    %vm134 = vcmask 203776
    %v136 = vsel %vm134, %v124, 0
    %vm138 = vcmask 1040384
    %v140 = vsel %vm138, %v128, 0
    %142 = vmatprep.subr.mxu0 0.0
    %143 = vmatpush1.msra.mxu0 %v125
    %144 = vmatprep.subr.mxu0 0.0
    %145 = vmatpush1.msra.mxu0 %v126
    %146 = vmatprep.subr.mxu0 0.0
    %147 = vmatpush1.msra.mxu0 %v127
    %148 = vmatprep.subr.mxu0 0.0
    %149 = vmatpush1.msra.mxu0 %v140
    %150 = vmatprep.subr.mxu0 0.0
    %151 = vmatpush1.msra.mxu0 0.0
    %152 = vmatprep.subr.mxu0 0.0
    %153 = vmatpush1.msra.mxu0 0.0
    %154 = vmatprep.subr.mxu0 0.0
    %155 = vmatpush1.msra.mxu0 0.0
    %156 = vmatprep.subr.mxu0 0.0
    %157 = vmatpush1.msra.mxu0 0.0
    %158 = vmatprep.subr.mxu0 0.0
    %159 = vmatpush1.msra.mxu0 0.0
    %160 = vmatprep.subr.mxu0 0.0
    %161 = vmatpush1.msra.mxu0 0.0
    %162 = vmatprep.subr.mxu0 0.0
    %163 = vmatpush1.msra.mxu0 0.0
    %164 = vmatprep.subr.mxu0 0.0
    %165 = vmatpush1.msra.mxu0 0.0
    %166 = vmatprep.subr.mxu0 0.0
    %167 = vmatpush1.msra.mxu0 0.0
    %168 = vmatprep.subr.mxu0 0.0
    %169 = vmatpush1.msra.mxu0 0.0
    %170 = vmatprep.subr.mxu0 0.0
    %171 = vmatpush1.msra.mxu0 0.0
    %172 = vmatprep.subr.mxu0 0.0
    %173 = vmatpush1.msra.mxu0 0.0
    %174 = vmatprep.subr.mxu0 0.0
    %175 = vmatpush1.msra.mxu0 0.0
    %176 = vmatprep.subr.mxu0 0.0
    %177 = vmatpush1.msra.mxu0 0.0
    %178 = vmatprep.subr.mxu0 0.0
    %179 = vmatpush1.msra.mxu0 0.0
    %180 = vmatprep.subr.mxu0 0.0
    %181 = vmatpush1.msra.mxu0 0.0
    %182 = vmatprep.subr.mxu0 0.0
    %183 = vmatpush1.msra.mxu0 0.0
    %184 = vmatprep.subr.mxu0 0.0
    %185 = vmatpush1.msra.mxu0 0.0
    %186 = vmatprep.subr.mxu0 0.0
    %187 = vmatpush1.msra.mxu0 0.0
    %188 = vmatprep.subr.mxu0 0.0
    %189 = vmatpush1.msra.mxu0 0.0
    %190 = vmatprep.subr.mxu0 0.0
    %191 = vmatpush1.msra.mxu0 0.0
    %192 = vmatprep.subr.mxu0 0.0
    %193 = vmatpush1.msra.mxu0 0.0
    %194 = vmatprep.subr.mxu0 0.0
    %195 = vmatpush1.msra.mxu0 0.0
    %196 = vmatprep.subr.mxu0 0.0
    %197 = vmatpush1.msra.mxu0 0.0
    %198 = vmatprep.subr.mxu0 0.0
    %199 = vmatpush1.msra.mxu0 0.0
    %200 = vmatprep.subr.mxu0 0.0
    %201 = vmatpush1.msra.mxu0 0.0
    %202 = vmatprep.subr.mxu0 0.0
    %203 = vmatpush1.msra.mxu0 0.0
    %204 = vmatprep.subr.mxu0 0.0
    %205 = vmatpush1.msra.mxu0 0.0
    %206 = vmatprep.mubr.f32.mxu0 0.0
    %207 = vmatmul.mubr.f32.gmra.mrb[0].mxu0 %v136
    %v208 = vpop.f32.mrb[0].mxu0
    %v209 = vadd.f32 %v133, %v208
    %v210 = vpop.f32.mrb[0].mxu0
    %211 = vdwg.mxu0
    %v212 = vmax.f32 %v209, 0.0
    %v213 = vld [vmem:[#allocation2 + $0x28] sm:$0xff]
    %v214 = vld [vmem:[#allocation2 + $0x30] sm:$0xff]
    %v215 = vld [vmem:[#allocation2 + $0x38] sm:$0xff]
    %v216 = vld [vmem:[#allocation2 + $0x40] sm:$0xff]
    %v217 = vld [vmem:[#allocation2 + $0x48] sm:$0xff]
    %v218 = vld [vmem:[#allocation2 + $0x50] sm:$0xff]
    %v219 = vld [vmem:[#allocation2 + $0x58] sm:$0x3]
    %v220 = vld [vmem:[%s2 + $0x2] sm:$0x1]
    %v221 = vlaneseq
    %v222 = vshrl.u32 %v221, 7
    %v223 = vsub.s32 0, %v222
    %v224 = vrot.slane %v220, %v223
    %vm225 = vcmask 408576
    %v227 = vsel %vm225, %v212, 0
    %vm229 = vcmask 1041408
    %v231 = vsel %vm229, %v219, 0
    %233 = vmatprep.subr.mxu0 0.0
    %234 = vmatpush1.msra.mxu0 %v213
    %235 = vmatprep.subr.mxu0 0.0
    %236 = vmatpush1.msra.mxu0 %v214
    %237 = vmatprep.subr.mxu0 0.0
    %238 = vmatpush1.msra.mxu0 %v215
    %239 = vmatprep.subr.mxu0 0.0
    %240 = vmatpush1.msra.mxu0 %v216
    %241 = vmatprep.subr.mxu0 0.0
    %242 = vmatpush1.msra.mxu0 %v217
    %243 = vmatprep.subr.mxu0 0.0
    %244 = vmatpush1.msra.mxu0 %v218
    %245 = vmatprep.subr.mxu0 0.0
    %246 = vmatpush1.msra.mxu0 %v231
    %247 = vmatprep.subr.mxu0 0.0
    %248 = vmatpush1.msra.mxu0 0.0
    %249 = vmatprep.subr.mxu0 0.0
    %250 = vmatpush1.msra.mxu0 0.0
    %251 = vmatprep.subr.mxu0 0.0
    %252 = vmatpush1.msra.mxu0 0.0
    %253 = vmatprep.subr.mxu0 0.0
    %254 = vmatpush1.msra.mxu0 0.0
    %255 = vmatprep.subr.mxu0 0.0
    %256 = vmatpush1.msra.mxu0 0.0
    %257 = vmatprep.subr.mxu0 0.0
    %258 = vmatpush1.msra.mxu0 0.0
    %259 = vmatprep.subr.mxu0 0.0
    %260 = vmatpush1.msra.mxu0 0.0
    %261 = vmatprep.subr.mxu0 0.0
    %262 = vmatpush1.msra.mxu0 0.0
    %263 = vmatprep.subr.mxu0 0.0
    %264 = vmatpush1.msra.mxu0 0.0
    %265 = vmatprep.subr.mxu0 0.0
    %266 = vmatpush1.msra.mxu0 0.0
    %267 = vmatprep.subr.mxu0 0.0
    %268 = vmatpush1.msra.mxu0 0.0
    %269 = vmatprep.subr.mxu0 0.0
    %270 = vmatpush1.msra.mxu0 0.0
    %271 = vmatprep.subr.mxu0 0.0
    %272 = vmatpush1.msra.mxu0 0.0
    %273 = vmatprep.subr.mxu0 0.0
    %274 = vmatpush1.msra.mxu0 0.0
    %275 = vmatprep.subr.mxu0 0.0
    %276 = vmatpush1.msra.mxu0 0.0
    %277 = vmatprep.subr.mxu0 0.0
    %278 = vmatpush1.msra.mxu0 0.0
    %279 = vmatprep.subr.mxu0 0.0
    %280 = vmatpush1.msra.mxu0 0.0
    %281 = vmatprep.subr.mxu0 0.0
    %282 = vmatpush1.msra.mxu0 0.0
    %283 = vmatprep.subr.mxu0 0.0
    %284 = vmatpush1.msra.mxu0 0.0
    %285 = vmatprep.subr.mxu0 0.0
    %286 = vmatpush1.msra.mxu0 0.0
    %287 = vmatprep.subr.mxu0 0.0
    %288 = vmatpush1.msra.mxu0 0.0
    %289 = vmatprep.subr.mxu0 0.0
    %290 = vmatpush1.msra.mxu0 0.0
    %291 = vmatprep.subr.mxu0 0.0
    %292 = vmatpush1.msra.mxu0 0.0
    %293 = vmatprep.subr.mxu0 0.0
    %294 = vmatpush1.msra.mxu0 0.0
    %295 = vmatprep.subr.mxu0 0.0
    %296 = vmatpush1.msra.mxu0 0.0
    %297 = vmatprep.mubr.f32.mxu0 0.0
    %298 = vmatmul.mubr.f32.gmra.mrb[0].mxu0 %v227
    %v299 = vpop.f32.mrb[0].mxu0
    %v300 = vadd.f32 %v224, %v299
    %v301 = vpop.f32.mrb[0].mxu0
    %302 = vdwg.mxu0
    %v303 = vrot.slane %v300, 4
    %v304 = vmax.f32 %v300, %v303
    %v305 = vrot.slane %v304, 2
    %v306 = vmax.f32 %v304, %v305
    %v307 = vrot.slane %v306, 1
    %v308 = vmax.f32 %v306, %v307
    %v309 = vsub.f32 %v300, %v308
    %v310 = vmul.f32 %v309, 1.442695
    %v311 = vpow.pop %v310
    %v312 = vrot.slane %v311, 4
    %v313 = vadd.f32 %v311, %v312
    %v314 = vrot.slane %v313, 2
    %v315 = vadd.f32 %v313, %v314
    %v316 = vrot.slane %v315, 1
    %v317 = vadd.f32 %v315, %v316
    %v318 = vlog2.pop %v317
    %v319 = vmul.f32 %v318, 0.6931472
    %v320 = vadd.f32 %v319, %v308
    %v321 = vsub.f32 %v300, %v320
    %v322 = vmax.f32 %v300, 0.0
    %v323 = vld [vmem:[#allocation2 + $0x80] sm:$0xff]
    %v324 = vld [vmem:[#allocation2 + $0x88] sm:$0xff]
    %v325 = vld [vmem:[#allocation2 + $0x90] sm:$0xff]
    %v326 = vld [vmem:[#allocation2 + $0x98] sm:$0xff]
    %v327 = vld [vmem:[#allocation2 + $0xa0] sm:$0xff]
    %v328 = vld [vmem:[#allocation2 + $0xa8] sm:$0xff]
    %v329 = vld [vmem:[#allocation2 + $0xb0] sm:$0xff]
    %v330 = vld [vmem:[#allocation2 + $0xb8] sm:$0xff]
    %v331 = vld [vmem:[#allocation2 + $0xc0] sm:$0xff]
    %v332 = vld [vmem:[#allocation2 + $0xc8] sm:$0xff]
    %v333 = vld [vmem:[#allocation2 + $0xd0] sm:$0xff]
    %v334 = vld [vmem:[#allocation2 + $0xd8] sm:$0xff]
    %v335 = vld [vmem:[#allocation2 + $0xe0] sm:$0xff]
    %v336 = vld [vmem:[#allocation2 + $0xe8] sm:$0xff]
    %v337 = vld [vmem:[#allocation2 + $0xf0] sm:$0xff]
    %v338 = vld [vmem:[#allocation2 + $0xf8] sm:$0xff]
    %v339 = vld [vmem:[%s2 + $0x3] sm:$0x1]
    %v340 = vlaneseq
    %v341 = vshrl.u32 %v340, 7
    %v342 = vsub.s32 0, %v341
    %v343 = vrot.slane %v339, %v342
    %344 = vmatprep.subr.mxu0 0.0
    %345 = vmatpush1.msra.mxu0 %v323
    %346 = vmatprep.subr.mxu0 0.0
    %347 = vmatpush1.msra.mxu0 %v324
    %348 = vmatprep.subr.mxu0 0.0
    %349 = vmatpush1.msra.mxu0 %v325
    %350 = vmatprep.subr.mxu0 0.0
    %351 = vmatpush1.msra.mxu0 %v326
    %352 = vmatprep.subr.mxu0 0.0
    %353 = vmatpush1.msra.mxu0 %v327
    %354 = vmatprep.subr.mxu0 0.0
    %355 = vmatpush1.msra.mxu0 %v328
    %356 = vmatprep.subr.mxu0 0.0
    %357 = vmatpush1.msra.mxu0 %v329
    %358 = vmatprep.subr.mxu0 0.0
    %359 = vmatpush1.msra.mxu0 %v330
    %360 = vmatprep.subr.mxu0 0.0
    %361 = vmatpush1.msra.mxu0 %v331
    %362 = vmatprep.subr.mxu0 0.0
    %363 = vmatpush1.msra.mxu0 %v332
    %364 = vmatprep.subr.mxu0 0.0
    %365 = vmatpush1.msra.mxu0 %v333
    %366 = vmatprep.subr.mxu0 0.0
    %367 = vmatpush1.msra.mxu0 %v334
    %368 = vmatprep.subr.mxu0 0.0
    %369 = vmatpush1.msra.mxu0 %v335
    %370 = vmatprep.subr.mxu0 0.0
    %371 = vmatpush1.msra.mxu0 %v336
    %372 = vmatprep.subr.mxu0 0.0
    %373 = vmatpush1.msra.mxu0 %v337
    %374 = vmatprep.subr.mxu0 0.0
    %375 = vmatpush1.msra.mxu0 %v338
    %376 = vmatprep.subr.mxu0 0.0
    %377 = vmatpush1.msra.mxu0 0.0
    %378 = vmatprep.subr.mxu0 0.0
    %379 = vmatpush1.msra.mxu0 0.0
    %380 = vmatprep.subr.mxu0 0.0
    %381 = vmatpush1.msra.mxu0 0.0
    %382 = vmatprep.subr.mxu0 0.0
    %383 = vmatpush1.msra.mxu0 0.0
    %384 = vmatprep.subr.mxu0 0.0
    %385 = vmatpush1.msra.mxu0 0.0
    %386 = vmatprep.subr.mxu0 0.0
    %387 = vmatpush1.msra.mxu0 0.0
    %388 = vmatprep.subr.mxu0 0.0
    %389 = vmatpush1.msra.mxu0 0.0
    %390 = vmatprep.subr.mxu0 0.0
    %391 = vmatpush1.msra.mxu0 0.0
    %392 = vmatprep.subr.mxu0 0.0
    %393 = vmatpush1.msra.mxu0 0.0
    %394 = vmatprep.subr.mxu0 0.0
    %395 = vmatpush1.msra.mxu0 0.0
    %396 = vmatprep.subr.mxu0 0.0
    %397 = vmatpush1.msra.mxu0 0.0
    %398 = vmatprep.subr.mxu0 0.0
    %399 = vmatpush1.msra.mxu0 0.0
    %400 = vmatprep.subr.mxu0 0.0
    %401 = vmatpush1.msra.mxu0 0.0
    %402 = vmatprep.subr.mxu0 0.0
    %403 = vmatpush1.msra.mxu0 0.0
    %404 = vmatprep.subr.mxu0 0.0
    %405 = vmatpush1.msra.mxu0 0.0
    %406 = vmatprep.subr.mxu0 0.0
    %407 = vmatpush1.msra.mxu0 0.0
    %408 = vmatprep.mubr.f32.mxu0 0.0
    %409 = vmatmul.mubr.f32.gmra.mrb[0].mxu0 %v322
    %v410 = vpop.f32.mrb[0].mxu0
    %v411 = vadd.f32 %v343, %v410
    %v412 = vpop.f32.mrb[0].mxu0
    %413 = vdwg.mxu0
    %v414 = vtanh.pop %v411
    %v415 = vlaneseq
    %v416 = vand.u32 %v415, 127
    %vm417 = vcmp.lt.s32.totalorder %v416, 2
    %v418 = vsel %vm417, %v321, %v414
    %419 = vst [vmem:[%s3] sm:$0xff] %v418
    // Predicated region
    $region18: #{actor_critic_forward.1} parent=1 // pred_check
      _
    $region19: #{actor_critic_forward.1} parent=1 // pred_check_branch
      %421 = sbr.rel (0) target = $region21
    $region20: #{actor_critic_forward.1} parent=1 // pred_region
      _
    $region21: #{actor_critic_forward.1} parent=1 // pred_fallthru
      _
    // Predicated region
    $region22: #{actor_critic_forward.1} parent=1 // pred_check
      _
    $region23: #{actor_critic_forward.1} parent=1 // pred_check_branch
      %423 = sbr.rel (0) target = $region25
    $region24: #{actor_critic_forward.1} parent=1 // pred_region
      _
    $region25: #{actor_critic_forward.1} parent=1 // pred_fallthru
      _
    %424 = vsyncpa [#allocation3], 1

</llo_original>
